<compile_context>
chip_gen: v7x
topology: tpu7x:2x2x1
jax: 0.10.0
libtpu: 0.0.40
codegen_flags: <defaults>
</compile_context>

<pallas_src>
import jax
import jax.numpy as jnp
from jax.experimental import pallas as pl
from jax.experimental.pallas import tpu as pltpu


def _round_up(x, m):
    return (x + m - 1) // m * m


def deepsdf_kernel(lat_ref, crd_ref, w1a_ref, w1b_ref, b1_ref, w2_ref, o_ref):
    # lat_ref: [tm, latent_dim]  bf16
    # crd_ref: [tm, 3]           bf16
    # w1a_ref: [latent_dim, H]   bf16
    # w1b_ref: [3, H]            bf16
    # b1_ref:  [1, H]            f32
    # w2_ref:  [H, 1]            f32
    # o_ref:   [tm, 1]           f32
    # Fused concat: dot(cat(lat, crd), W1) == dot(lat, W1a) + dot(crd, W1b).
    h = jnp.dot(lat_ref[...], w1a_ref[...], preferred_element_type=jnp.float32)
    h = h + jnp.dot(crd_ref[...], w1b_ref[...], preferred_element_type=jnp.float32)
    h = h + b1_ref[...]
    h = jnp.maximum(h, 0.0)                               # ReLU on VPU (f32)
    y = jnp.dot(h, w2_ref[...], preferred_element_type=jnp.float32)
    o_ref[...] = y.astype(o_ref.dtype)


def deepsdf_forward(latent_code, coords, w1, b1, w2, b2, *, tm=2048):
    n, latent_dim = latent_code.shape
    in_dim, hidden = w1.shape
    assert in_dim == latent_dim + 3, "w1 must be [latent_dim + 3, hidden]"
    assert coords.shape == (n, 3)

    # Split W1 so the latent/coords concat never materializes in HBM; cast the
    # per-point streams and W1 to bf16 (MXU-native), accumulate in f32.
    w1a = w1[:latent_dim].astype(jnp.bfloat16)            # [latent_dim, hidden]
    w1b = w1[latent_dim:].astype(jnp.bfloat16)            # [3, hidden]
    lat = latent_code.astype(jnp.bfloat16)
    crd = coords.astype(jnp.bfloat16)
    b1_2d = b1.reshape(1, hidden).astype(jnp.float32)
    w2_f32 = w2.reshape(hidden, 1).astype(jnp.float32)

    # Big row tiles amortize the per-step pipeline overhead; clamp to the
    # padded problem size and pad N so any point count works.
    tm_eff = min(tm, _round_up(n, 8))
    n_pad = _round_up(n, tm_eff)
    if n_pad != n:
        lat = jnp.pad(lat, ((0, n_pad - n), (0, 0)))
        crd = jnp.pad(crd, ((0, n_pad - n), (0, 0)))

    grid = (n_pad // tm_eff,)
    out = pl.pallas_call(
        deepsdf_kernel,
        out_shape=jax.ShapeDtypeStruct((n_pad, 1), jnp.float32),
        grid_spec=pltpu.PrefetchScalarGridSpec(
            num_scalar_prefetch=0,
            grid=grid,
            in_specs=[
                # Per-point streams: tile rows, full (small) feature width.
                pl.BlockSpec((tm_eff, latent_dim), lambda i: (i, 0)),
                pl.BlockSpec((tm_eff, 3), lambda i: (i, 0)),
                # Weights / bias: full arrays, resident across grid steps.
                pl.BlockSpec((latent_dim, hidden), lambda i: (0, 0)),
                pl.BlockSpec((3, hidden), lambda i: (0, 0)),
                pl.BlockSpec((1, hidden), lambda i: (0, 0)),
                pl.BlockSpec((hidden, 1), lambda i: (0, 0)),
            ],
            out_specs=pl.BlockSpec((tm_eff, 1), lambda i: (i, 0)),
        ),
        compiler_params=pltpu.CompilerParams(
            # Points are independent -> shard the 1-D grid across TensorCores
            # (2 TCs on v7x) when the grid has many steps.
            dimension_semantics=("parallel",),
        ),
    )(lat, crd, w1a, w1b, b1_2d, w2_f32)

    # Scalar b2 added outside the kernel; XLA fuses it with the de-pad slice.
    return out[:n] + b2.reshape(1, 1).astype(jnp.float32)


def init_params(key, latent_dim, hidden=256):
    # PyTorch nn.Linear-style init; weights stored transposed so the kernel
    # computes x @ W directly.
    in_dim = latent_dim + 3
    k1, k2, k3, k4 = jax.random.split(key, 4)
    lim1 = 1.0 / jnp.sqrt(in_dim)
    lim2 = 1.0 / jnp.sqrt(hidden)
    w1 = jax.random.uniform(k1, (in_dim, hidden), jnp.float32, -lim1, lim1)
    b1 = jax.random.uniform(k2, (hidden,), jnp.float32, -lim1, lim1)
    w2 = jax.random.uniform(k3, (hidden, 1), jnp.float32, -lim2, lim2)
    b2 = jax.random.uniform(k4, (1,), jnp.float32, -lim2, lim2)
    return w1, b1, w2, b2


if __name__ == "__main__":
    latent_dim = 32
    hidden = 256
    n_points = 300  # not a multiple of the tile -> exercises padding + 3-step grid

    key = jax.random.PRNGKey(0)
    kp, kl, kc = jax.random.split(key, 3)

    w1, b1, w2, b2 = init_params(kp, latent_dim, hidden)
    latent_code = jax.random.normal(kl, (n_points, latent_dim), jnp.float32)
    coords = jax.random.normal(kc, (n_points, 3), jnp.float32)

    # Small tile for the demo so the grid has several steps; production use
    # keeps the default tm=2048 (sweep 2048-4096).
    out = deepsdf_forward(latent_code, coords, w1, b1, w2, b2, tm=128)
    out = jax.block_until_ready(out)

    # Cross-check against the pure-f32 JAX reference (bf16 inputs -> loose tol).
    x = jnp.concatenate([latent_code, coords], axis=-1)
    ref = jnp.maximum(x @ w1 + b1, 0.0) @ w2 + b2
    assert out.shape == (n_points, 1)
    assert jnp.allclose(out, ref, atol=2e-2, rtol=2e-2), (
        float(jnp.max(jnp.abs(out - ref))))

    print("KERNEL_OK")
</pallas_src>

<mosaic_0001>
module attributes {stable_mosaic.version = 11 : i64} {
  func.func @deepsdf_kernel(%arg0: i32, %arg1: memref<128x32xbf16, #tpu.memory_space<vmem>>, %arg2: memref<128x3xbf16, #tpu.memory_space<vmem>>, %arg3: memref<32x256xbf16, #tpu.memory_space<vmem>>, %arg4: memref<3x256xbf16, #tpu.memory_space<vmem>>, %arg5: memref<1x256xf32, #tpu.memory_space<vmem>>, %arg6: memref<256x1xf32, #tpu.memory_space<vmem>>, %arg7: memref<128x1xf32, #tpu.memory_space<vmem>>) attributes {dimension_semantics = [#tpu.dimension_semantics<parallel>], iteration_bounds = array<i64: 3>, scalar_prefetch = 0 : i64, scratch_operands = 0 : i64, tpu.core_type = #tpu.core_type<tc>, window_params = [{transform_indices = @transform_0, window_bounds = array<i64: 128, 32>}, {transform_indices = @transform_1, window_bounds = array<i64: 128, 3>}, {pipeline_mode = #tpu.pipeline_mode<synchronous>, transform_indices = @transform_2, window_bounds = array<i64: 32, 256>}, {pipeline_mode = #tpu.pipeline_mode<synchronous>, transform_indices = @transform_3, window_bounds = array<i64: 3, 256>}, {pipeline_mode = #tpu.pipeline_mode<synchronous>, transform_indices = @transform_4, window_bounds = array<i64: 1, 256>}, {pipeline_mode = #tpu.pipeline_mode<synchronous>, transform_indices = @transform_5, window_bounds = array<i64: 256, 1>}, {transform_indices = @transform_6, window_bounds = array<i64: 128, 1>}]} {
    %c0 = arith.constant 0 : index
    %c0_0 = arith.constant 0 : index
    %0 = vector.load %arg1[%c0, %c0_0] : memref<128x32xbf16, #tpu.memory_space<vmem>>, vector<128x32xbf16>
    %c0_1 = arith.constant 0 : index
    %c0_2 = arith.constant 0 : index
    %1 = vector.load %arg3[%c0_1, %c0_2] : memref<32x256xbf16, #tpu.memory_space<vmem>>, vector<32x256xbf16>
    %cst = arith.constant dense<0.000000e+00> : vector<128x256xf32>
    %2 = tpu.matmul %0, %1, %cst {dimension_numbers = #tpu.dot_dimension_numbers<[1], [0], [0], [1], [0, 0, 1, 1], [], []>} : vector<128x32xbf16>, vector<32x256xbf16>, vector<128x256xf32> -> vector<128x256xf32>
    %c0_3 = arith.constant 0 : index
    %c0_4 = arith.constant 0 : index
    %3 = vector.load %arg2[%c0_3, %c0_4] : memref<128x3xbf16, #tpu.memory_space<vmem>>, vector<128x3xbf16>
    %c0_5 = arith.constant 0 : index
    %c0_6 = arith.constant 0 : index
    %4 = vector.load %arg4[%c0_5, %c0_6] : memref<3x256xbf16, #tpu.memory_space<vmem>>, vector<3x256xbf16>
    %cst_7 = arith.constant dense<0.000000e+00> : vector<128x256xf32>
    %5 = tpu.matmul %3, %4, %cst_7 {dimension_numbers = #tpu.dot_dimension_numbers<[1], [0], [0], [1], [0, 0, 1, 1], [], []>} : vector<128x3xbf16>, vector<3x256xbf16>, vector<128x256xf32> -> vector<128x256xf32>
    %6 = arith.addf %2, %5 : vector<128x256xf32>
    %c0_8 = arith.constant 0 : index
    %c0_9 = arith.constant 0 : index
    %7 = vector.load %arg5[%c0_8, %c0_9] : memref<1x256xf32, #tpu.memory_space<vmem>>, vector<1x256xf32>
    %8 = vector.broadcast %7 : vector<1x256xf32> to vector<128x256xf32>
    %9 = arith.addf %6, %8 : vector<128x256xf32>
    %cst_10 = arith.constant 0.000000e+00 : f32
    %10 = vector.broadcast %cst_10 : f32 to vector<128x256xf32>
    %11 = arith.maximumf %9, %10 : vector<128x256xf32>
    %c0_11 = arith.constant 0 : index
    %c0_12 = arith.constant 0 : index
    %12 = vector.load %arg6[%c0_11, %c0_12] : memref<256x1xf32, #tpu.memory_space<vmem>>, vector<256x1xf32>
    %cst_13 = arith.constant dense<0.000000e+00> : vector<128x1xf32>
    %13 = tpu.matmul %11, %12, %cst_13 {dimension_numbers = #tpu.dot_dimension_numbers<[1], [0], [0], [1], [0, 0, 1, 1], [], []>} : vector<128x256xf32>, vector<256x1xf32>, vector<128x1xf32> -> vector<128x1xf32>
    %c0_14 = arith.constant 0 : index
    %c0_15 = arith.constant 0 : index
    %14 = vector.load %arg7[%c0_14, %c0_15] : memref<128x1xf32, #tpu.memory_space<vmem>>, vector<128x1xf32>
    tpu.vector_store %arg7[%c0_14, %c0_15], %13 {strides = array<i32>} : memref<128x1xf32, #tpu.memory_space<vmem>>, vector<128x1xf32>,
    return
  }
  func.func @transform_0(%arg0: i32) -> (i32, i32) {
    %c0_i32 = arith.constant 0 : i32
    %c0_i32_0 = arith.constant 0 : i32
    return %arg0, %c0_i32 : i32, i32
  }
  func.func @transform_1(%arg0: i32) -> (i32, i32) {
    %c0_i32 = arith.constant 0 : i32
    %c0_i32_0 = arith.constant 0 : i32
    return %arg0, %c0_i32 : i32, i32
  }
  func.func @transform_2(%arg0: i32) -> (i32, i32) {
    %c0_i32 = arith.constant 0 : i32
    %c0_i32_0 = arith.constant 0 : i32
    %c0_i32_1 = arith.constant 0 : i32
    return %c0_i32, %c0_i32_0 : i32, i32
  }
  func.func @transform_3(%arg0: i32) -> (i32, i32) {
    %c0_i32 = arith.constant 0 : i32
    %c0_i32_0 = arith.constant 0 : i32
    %c0_i32_1 = arith.constant 0 : i32
    return %c0_i32, %c0_i32_0 : i32, i32
  }
  func.func @transform_4(%arg0: i32) -> (i32, i32) {
    %c0_i32 = arith.constant 0 : i32
    %c0_i32_0 = arith.constant 0 : i32
    %c0_i32_1 = arith.constant 0 : i32
    return %c0_i32, %c0_i32_0 : i32, i32
  }
  func.func @transform_5(%arg0: i32) -> (i32, i32) {
    %c0_i32 = arith.constant 0 : i32
    %c0_i32_0 = arith.constant 0 : i32
    %c0_i32_1 = arith.constant 0 : i32
    return %c0_i32, %c0_i32_0 : i32, i32
  }
  func.func @transform_6(%arg0: i32) -> (i32, i32) {
    %c0_i32 = arith.constant 0 : i32
    %c0_i32_0 = arith.constant 0 : i32
    return %arg0, %c0_i32 : i32, i32
  }
}

</mosaic_0001>

<llo_original>
// kernel: tpu_custom_call.1
$region0: #{tpu_custom_call.1}
  #allocation0 [shape = 'u32[]', space=smem, size = 0x4, offset = 0x4, fixed_abs, tag = 'smem constant byte address 0x4 - core index']
  #allocation1 [shape = 'u32[144,128]{1,0:T(1,128)}', space=vmem, size = 0x12000, scoped, tag = 'internal scratch']
  %s0 = inlined_call_operand.vmem [shape: bf16[384,32], index: 0, kind: input, shape index: {}]
  %s1 = inlined_call_operand.vmem [shape: bf16[384,3], index: 1, kind: input, shape index: {}]
  %s2 = inlined_call_operand.vmem [shape: bf16[32,256], index: 2, kind: input, shape index: {}]
  %s3 = inlined_call_operand.vmem [shape: bf16[3,256], index: 3, kind: input, shape index: {}]
  %s4 = inlined_call_operand.vmem [shape: f32[1,256], index: 4, kind: input, shape index: {}]
  %s5 = inlined_call_operand.vmem [shape: f32[256,1], index: 5, kind: input, shape index: {}]
  %s6 = inlined_call_operand.vmem [shape: f32[384,1], index: 6, kind: output, shape index: {}]
  %s7 = sld [smem:[#allocation0]]
  $region57: #{tpu_custom_call.1} parent=0
    _
  %s9 = ssub.s32 1, %s7
  %s10 = scalar_select 0, %s9, %s7
  loop: start=0, step=1, limit=5
  $region2: #{tpu_custom_call.1} parent=0 // loop_pre_header
    _
  $region3: #{tpu_custom_call.1} parent=0 // loop_header
    %s12 = sphi 0, %s16
    %p13 = scmp.ge.s32.totalorder %s12, 5
    %s22 = sphi 0, %s24
    %s25 = sphi 0, %s22
    %s26 = sphi 0, %s25
    %s42 = sphi 0, %s26
    %s48 = sphi 0, %s50
    %s51 = sphi 0, %s48
    %s52 = sphi 0, %s51
    %s68 = sphi 0, %s52
    %s72 = sphi 0, %s72
    %s74 = sphi 0, %s72
    %s75 = sphi 0, %s74
    %s89 = sphi 0, %s75
    %s93 = sphi 0, %s93
    %s95 = sphi 0, %s93
    %s96 = sphi 0, %s95
    %s110 = sphi 0, %s96
    %s114 = sphi 0, %s114
    %s116 = sphi 0, %s114
    %s117 = sphi 0, %s116
    %s131 = sphi 0, %s117
    %s135 = sphi 0, %s135
    %s137 = sphi 0, %s135
    %s138 = sphi 0, %s137
    %s152 = sphi 0, %s138
    %s158 = sphi 0, %s160
    %s161 = sphi 0, %s158
    %s162 = sphi 0, %s161
    %s178 = sphi 0, %s162
  $region4: #{tpu_custom_call.1} parent=0 // loop_header_branch
    %15 = sbr.rel (%p13) target = $region8
  $region5: #{tpu_custom_call.1} parent=0 // loop_body
    %s17 = ssub.s32 %s12, 1
    %s18 = ssub.s32 %s12, 2
    %s19 = sadd.s32 %s12, 1
    %s20 = ssub.s32 %s12, %s19
    %p21 = scmp.eq.s32.totalorder %s20, 0
    %s23 = sadd.s32 %s22, 1
    %s24 = scalar_select %p21, %s22, %s23
    %p27 = pneg %p21
    %p28 = scmp.eq.s32.totalorder %s12, 2
    %p29 = por %p27, %p28
    %p30 = scmp.ne.s32.totalorder %s22, %s25
    %p31 = scmp.eq.s32.totalorder %s12, 0
    %p32 = por %p30, %p31
    %p33 = scmp.ne.s32.totalorder %s22, %s25
    %p34 = scmp.eq.s32.totalorder %s17, 2
    %p35 = por %p33, %p34
    %p36 = scmp.ne.s32.totalorder %s25, %s26
    %p37 = scmp.eq.s32.totalorder %s17, 0
    %p38 = por %p36, %p37
    %p39 = scmp.ne.s32.totalorder %s25, %s26
    %p40 = scmp.eq.s32.totalorder %s18, 2
    %p41 = por %p39, %p40
    %p43 = scmp.ne.s32.totalorder %s26, %s42
    %p44 = scmp.eq.s32.totalorder %s18, 0
    %p45 = por %p43, %p44
    %s46 = ssub.s32 %s12, %s19
    %p47 = scmp.eq.s32.totalorder %s46, 0
    %s49 = sadd.s32 %s48, 1
    %s50 = scalar_select %p47, %s48, %s49
    %p53 = pneg %p47
    %p54 = scmp.eq.s32.totalorder %s12, 2
    %p55 = por %p53, %p54
    %p56 = scmp.ne.s32.totalorder %s48, %s51
    %p57 = scmp.eq.s32.totalorder %s12, 0
    %p58 = por %p56, %p57
    %p59 = scmp.ne.s32.totalorder %s48, %s51
    %p60 = scmp.eq.s32.totalorder %s17, 2
    %p61 = por %p59, %p60
    %p62 = scmp.ne.s32.totalorder %s51, %s52
    %p63 = scmp.eq.s32.totalorder %s17, 0
    %p64 = por %p62, %p63
    %p65 = scmp.ne.s32.totalorder %s51, %s52
    %p66 = scmp.eq.s32.totalorder %s18, 2
    %p67 = por %p65, %p66
    %p69 = scmp.ne.s32.totalorder %s52, %s68
    %p70 = scmp.eq.s32.totalorder %s18, 0
    %p71 = por %p69, %p70
    %s73 = sadd.s32 %s72, 1
    %p76 = scmp.eq.s32.totalorder %s12, 2
    %p77 = scmp.ne.s32.totalorder %s72, %s74
    %p78 = scmp.eq.s32.totalorder %s12, 0
    %p79 = por %p77, %p78
    %p80 = scmp.ne.s32.totalorder %s72, %s74
    %p81 = scmp.eq.s32.totalorder %s17, 2
    %p82 = por %p80, %p81
    %p83 = scmp.ne.s32.totalorder %s74, %s75
    %p84 = scmp.eq.s32.totalorder %s17, 0
    %p85 = por %p83, %p84
    %p86 = scmp.ne.s32.totalorder %s74, %s75
    %p87 = scmp.eq.s32.totalorder %s18, 2
    %p88 = por %p86, %p87
    %p90 = scmp.ne.s32.totalorder %s75, %s89
    %p91 = scmp.eq.s32.totalorder %s18, 0
    %p92 = por %p90, %p91
    %s94 = sadd.s32 %s93, 1
    %p97 = scmp.eq.s32.totalorder %s12, 2
    %p98 = scmp.ne.s32.totalorder %s93, %s95
    %p99 = scmp.eq.s32.totalorder %s12, 0
    %p100 = por %p98, %p99
    %p101 = scmp.ne.s32.totalorder %s93, %s95
    %p102 = scmp.eq.s32.totalorder %s17, 2
    %p103 = por %p101, %p102
    %p104 = scmp.ne.s32.totalorder %s95, %s96
    %p105 = scmp.eq.s32.totalorder %s17, 0
    %p106 = por %p104, %p105
    %p107 = scmp.ne.s32.totalorder %s95, %s96
    %p108 = scmp.eq.s32.totalorder %s18, 2
    %p109 = por %p107, %p108
    %p111 = scmp.ne.s32.totalorder %s96, %s110
    %p112 = scmp.eq.s32.totalorder %s18, 0
    %p113 = por %p111, %p112
    %s115 = sadd.s32 %s114, 1
    %p118 = scmp.eq.s32.totalorder %s12, 2
    %p119 = scmp.ne.s32.totalorder %s114, %s116
    %p120 = scmp.eq.s32.totalorder %s12, 0
    %p121 = por %p119, %p120
    %p122 = scmp.ne.s32.totalorder %s114, %s116
    %p123 = scmp.eq.s32.totalorder %s17, 2
    %p124 = por %p122, %p123
    %p125 = scmp.ne.s32.totalorder %s116, %s117
    %p126 = scmp.eq.s32.totalorder %s17, 0
    %p127 = por %p125, %p126
    %p128 = scmp.ne.s32.totalorder %s116, %s117
    %p129 = scmp.eq.s32.totalorder %s18, 2
    %p130 = por %p128, %p129
    %p132 = scmp.ne.s32.totalorder %s117, %s131
    %p133 = scmp.eq.s32.totalorder %s18, 0
    %p134 = por %p132, %p133
    %s136 = sadd.s32 %s135, 1
    %p139 = scmp.eq.s32.totalorder %s12, 2
    %p140 = scmp.ne.s32.totalorder %s135, %s137
    %p141 = scmp.eq.s32.totalorder %s12, 0
    %p142 = por %p140, %p141
    %p143 = scmp.ne.s32.totalorder %s135, %s137
    %p144 = scmp.eq.s32.totalorder %s17, 2
    %p145 = por %p143, %p144
    %p146 = scmp.ne.s32.totalorder %s137, %s138
    %p147 = scmp.eq.s32.totalorder %s17, 0
    %p148 = por %p146, %p147
    %p149 = scmp.ne.s32.totalorder %s137, %s138
    %p150 = scmp.eq.s32.totalorder %s18, 2
    %p151 = por %p149, %p150
    %p153 = scmp.ne.s32.totalorder %s138, %s152
    %p154 = scmp.eq.s32.totalorder %s18, 0
    %p155 = por %p153, %p154
    %s156 = ssub.s32 %s12, %s19
    %p157 = scmp.eq.s32.totalorder %s156, 0
    %s159 = sadd.s32 %s158, 1
    %s160 = scalar_select %p157, %s158, %s159
    %p163 = pneg %p157
    %p164 = scmp.eq.s32.totalorder %s12, 2
    %p165 = por %p163, %p164
    %p166 = scmp.ne.s32.totalorder %s158, %s161
    %p167 = scmp.eq.s32.totalorder %s12, 0
    %p168 = por %p166, %p167
    %p169 = scmp.ne.s32.totalorder %s158, %s161
    %p170 = scmp.eq.s32.totalorder %s17, 2
    %p171 = por %p169, %p170
    %p172 = scmp.ne.s32.totalorder %s161, %s162
    %p173 = scmp.eq.s32.totalorder %s17, 0
    %p174 = por %p172, %p173
    %p175 = scmp.ne.s32.totalorder %s161, %s162
    %p176 = scmp.eq.s32.totalorder %s18, 2
    %p177 = por %p175, %p176
    %p179 = scmp.ne.s32.totalorder %s162, %s178
    %p180 = scmp.eq.s32.totalorder %s18, 0
    %p181 = por %p179, %p180
    %p182 = scmp.le.s32.totalorder 1, %s12
    %p183 = scmp.lt.s32.totalorder %s12, 4
    %p184 = pnand %p182, %p183
    %p185 = pneg %p184
    // Predicated region
    $region9: #{tpu_custom_call.1} parent=5 // pred_check
      _
    $region10: #{tpu_custom_call.1} parent=5 // pred_check_branch
      %187 = sbr.rel (%p184) target = $region12
    $region11: #{tpu_custom_call.1} parent=5 // pred_region
      %s188 = ssub.s32 %s12, 1
      // Predicated region
      $region13: #{tpu_custom_call.1} parent=11 // pred_check
        %p189 = pneg %p85
      $region14: #{tpu_custom_call.1} parent=11 // pred_check_branch
        %191 = sbr.rel (%p189) target = $region16
      $region15: #{tpu_custom_call.1} parent=11 // pred_region
        _
      $region16: #{tpu_custom_call.1} parent=11 // pred_fallthru
        _
      // Predicated region
      $region17: #{tpu_custom_call.1} parent=11 // pred_check
        %p192 = pneg %p106
      $region18: #{tpu_custom_call.1} parent=11 // pred_check_branch
        %194 = sbr.rel (%p192) target = $region20
      $region19: #{tpu_custom_call.1} parent=11 // pred_region
        _
      $region20: #{tpu_custom_call.1} parent=11 // pred_fallthru
        _
      // Predicated region
      $region21: #{tpu_custom_call.1} parent=11 // pred_check
        %p195 = pneg %p127
      $region22: #{tpu_custom_call.1} parent=11 // pred_check_branch
        %197 = sbr.rel (%p195) target = $region24
      $region23: #{tpu_custom_call.1} parent=11 // pred_region
        _
      $region24: #{tpu_custom_call.1} parent=11 // pred_fallthru
        _
      // Predicated region
      $region25: #{tpu_custom_call.1} parent=11 // pred_check
        %p198 = pneg %p148
      $region26: #{tpu_custom_call.1} parent=11 // pred_check_branch
        %200 = sbr.rel (%p198) target = $region28
      $region27: #{tpu_custom_call.1} parent=11 // pred_region
        _
      $region28: #{tpu_custom_call.1} parent=11 // pred_fallthru
        _
    $region12: #{tpu_custom_call.1} parent=5 // pred_fallthru
      _
    %p201 = scmp.lt.s32.totalorder %s12, 3
    // Predicated region
    $region29: #{tpu_custom_call.1} parent=5 // pred_check
      %p202 = pneg %p201
    $region30: #{tpu_custom_call.1} parent=5 // pred_check_branch
      %204 = sbr.rel (%p202) target = $region32
    $region31: #{tpu_custom_call.1} parent=5 // pred_region
      // Predicated region
      $region33: #{tpu_custom_call.1} parent=31 // pred_check
        %p205 = pneg %p32
      $region34: #{tpu_custom_call.1} parent=31 // pred_check_branch
        %207 = sbr.rel (%p205) target = $region36
      $region35: #{tpu_custom_call.1} parent=31 // pred_region
        %s208 = smul.u32 16, %s12
        %p209 = scmp.lt.s32.totalorder %s208, 47
        %s210 = scalar_select %p209, %s208, 47
        %s211 = smul.addr %s210, 4
        %s212 = scalar_lea.vmem %s0, %s211
        %s213 = smul.u32 16, %s12
      $region36: #{tpu_custom_call.1} parent=31 // pred_fallthru
        _
      // Predicated region
      $region37: #{tpu_custom_call.1} parent=31 // pred_check
        %p214 = pneg %p58
      $region38: #{tpu_custom_call.1} parent=31 // pred_check_branch
        %216 = sbr.rel (%p214) target = $region40
      $region39: #{tpu_custom_call.1} parent=31 // pred_region
        %s217 = smul.u32 16, %s12
        %p218 = scmp.lt.s32.totalorder %s217, 47
        %s219 = scalar_select %p218, %s217, 47
        %s220 = smul.addr %s219, 4
        %s221 = scalar_lea.vmem %s1, %s220
        %s222 = smul.u32 16, %s12
      $region40: #{tpu_custom_call.1} parent=31 // pred_fallthru
        _
    $region32: #{tpu_custom_call.1} parent=5 // pred_fallthru
      _
    %p223 = scmp.le.s32.totalorder 1, %s12
    %p224 = scmp.lt.s32.totalorder %s12, 4
    %p225 = pnand %p223, %p224
    %p226 = pneg %p225
    // Predicated region
    $region41: #{tpu_custom_call.1} parent=5 // pred_check
      _
    $region42: #{tpu_custom_call.1} parent=5 // pred_check_branch
      %228 = sbr.rel (%p225) target = $region44
    $region43: #{tpu_custom_call.1} parent=5 // pred_region
      %s229 = ssub.s32 %s12, 1
      %s230 = smul.u32 16, %s17
      %p231 = scmp.lt.s32.totalorder %s230, 47
      %s232 = scalar_select %p231, %s230, 47
      %s233 = smul.addr %s232, 4
      %s234 = scalar_lea.vmem %s0, %s233
      %p235 = pneg %p38
      %p236 = pneg %p35
      %s237 = smul.u32 16, %s17
      %p238 = scmp.lt.s32.totalorder %s237, 47
      %s239 = scalar_select %p238, %s237, 47
      %s240 = smul.addr %s239, 4
      %s241 = scalar_lea.vmem %s1, %s240
      %p242 = pneg %p64
      %p243 = pneg %p61
      %p244 = pneg %p85
      %p245 = pneg %p82
      %p246 = pneg %p106
      %p247 = pneg %p103
      %p248 = pneg %p127
      %p249 = pneg %p124
      %p250 = pneg %p148
      %p251 = pneg %p145
      %p252 = pneg %p174
      %p253 = pneg %p171
      %s254 = smul.u32 16, %s17
      %p255 = scmp.lt.s32.totalorder %s254, 47
      %s256 = scalar_select %p255, %s254, 47
      %s257 = smul.addr %s256, 8
      %s258 = scalar_lea.vmem %s6, %s257
      %s259 = smul.u32 16, %s17
      %p260 = scmp.lt.s32.totalorder %s259, 47
      %s261 = scalar_select %p260, %s259, 47
      %s262 = smul.addr %s261, 4
      %s263 = scalar_lea.vmem %s0, %s262
      %s264 = smul.u32 16, %s17
      %s265 = smul.u32 16, %s17
      %p266 = scmp.lt.s32.totalorder %s265, 47
      %s267 = scalar_select %p266, %s265, 47
      %s268 = smul.addr %s267, 4
      %s269 = scalar_lea.vmem %s1, %s268
      %s270 = smul.u32 16, %s17
      %s271 = smul.u32 16, %s17
      %p272 = scmp.lt.s32.totalorder %s271, 47
      %s273 = scalar_select %p272, %s271, 47
      %s274 = smul.addr %s273, 8
      %s275 = scalar_lea.vmem %s6, %s274
      %s276 = smul.u32 16, %s17
      %v278 = vld [vmem:[%s263] sm:$0xf]
      %v279 = vld [vmem:[%s263 + $0x4] sm:$0xf]
      %v280 = vld [vmem:[%s263 + $0x8] sm:$0xf]
      %v281 = vld [vmem:[%s263 + $0xc] sm:$0xf]
      %v282 = vld [vmem:[%s263 + $0x10] sm:$0xf]
      %v283 = vld [vmem:[%s263 + $0x14] sm:$0xf]
      %v284 = vld [vmem:[%s263 + $0x18] sm:$0xf]
      %v285 = vld [vmem:[%s263 + $0x1c] sm:$0xf]
      %v286 = vld [vmem:[%s263 + $0x20] sm:$0xf]
      %v287 = vld [vmem:[%s263 + $0x24] sm:$0xf]
      %v288 = vld [vmem:[%s263 + $0x28] sm:$0xf]
      %v289 = vld [vmem:[%s263 + $0x2c] sm:$0xf]
      %v290 = vld [vmem:[%s263 + $0x30] sm:$0xf]
      %v291 = vld [vmem:[%s263 + $0x34] sm:$0xf]
      %v292 = vld [vmem:[%s263 + $0x38] sm:$0xf]
      %v293 = vld [vmem:[%s263 + $0x3c] sm:$0xf]
      %v294 = vld [vmem:[%s2] sm:$0xff]
      %v295 = vld [vmem:[%s2 + $0x8] sm:$0xff]
      %v296 = vld [vmem:[%s2 + $0x10] sm:$0xff]
      %v297 = vld [vmem:[%s2 + $0x18] sm:$0xff]
      %v298 = vld [vmem:[%s269] sm:$0xf]
      %v299 = vld [vmem:[%s269 + $0x4] sm:$0xf]
      %v300 = vld [vmem:[%s269 + $0x8] sm:$0xf]
      %v301 = vld [vmem:[%s269 + $0xc] sm:$0xf]
      %v302 = vld [vmem:[%s269 + $0x10] sm:$0xf]
      %v303 = vld [vmem:[%s269 + $0x14] sm:$0xf]
      %v304 = vld [vmem:[%s269 + $0x18] sm:$0xf]
      %v305 = vld [vmem:[%s269 + $0x1c] sm:$0xf]
      %v306 = vld [vmem:[%s269 + $0x20] sm:$0xf]
      %v307 = vld [vmem:[%s269 + $0x24] sm:$0xf]
      %v308 = vld [vmem:[%s269 + $0x28] sm:$0xf]
      %v309 = vld [vmem:[%s269 + $0x2c] sm:$0xf]
      %v310 = vld [vmem:[%s269 + $0x30] sm:$0xf]
      %v311 = vld [vmem:[%s269 + $0x34] sm:$0xf]
      %v312 = vld [vmem:[%s269 + $0x38] sm:$0xf]
      %v313 = vld [vmem:[%s269 + $0x3c] sm:$0xf]
      %v314 = vld [vmem:[%s3] sm:$0xf]
      %v331 = vunpack.c.l.b16 %v298
      %v332 = vunpack.c.l.b16 %v299
      %v333 = vunpack.c.l.b16 %v300
      %v334 = vunpack.c.l.b16 %v301
      %v335 = vunpack.c.l.b16 %v302
      %v336 = vunpack.c.l.b16 %v303
      %v337 = vunpack.c.l.b16 %v304
      %v338 = vunpack.c.l.b16 %v305
      %v339 = vunpack.c.l.b16 %v306
      %v340 = vunpack.c.l.b16 %v307
      %v341 = vunpack.c.l.b16 %v308
      %v342 = vunpack.c.l.b16 %v309
      %v343 = vunpack.c.l.b16 %v310
      %v344 = vunpack.c.l.b16 %v311
      %v345 = vunpack.c.l.b16 %v312
      %v346 = vunpack.c.l.b16 %v313
      %v347 = vpack.c.b16 %v332, %v331
      %v348 = vpack.c.b16 %v334, %v333
      %v349 = vpack.c.b16 %v336, %v335
      %v350 = vpack.c.b16 %v338, %v337
      %v351 = vpack.c.b16 %v340, %v339
      %v352 = vpack.c.b16 %v342, %v341
      %v353 = vpack.c.b16 %v344, %v343
      %v354 = vpack.c.b16 %v346, %v345
      %v357 = vunpack.c.l.s4 1983009808
      %v358 = vunpack.c.0.s8 %v357
      %v359 = vlaneseq
      %v360 = vshrl.u32 %v359, 7
      %v361 = vsub.s32 %v358, %v360
      %v362 = vrot.slane %v314, %v361
      %v363 = vcombine.high %v362, %v362
      %vm364 = vcmask 23552
      %v366 = vsel %vm364, %v347, 0
      %v369 = vsel %vm364, %v348, 0
      %v372 = vsel %vm364, %v349, 0
      %v375 = vsel %vm364, %v350, 0
      %v378 = vsel %vm364, %v351, 0
      %v381 = vsel %vm364, %v352, 0
      %v384 = vsel %vm364, %v353, 0
      %v387 = vsel %vm364, %v354, 0
      %vm389 = vcmask 1040384
      %vm390 = vcmask 1041408
      %v391 = vsel %vm389, 4294967295, 65535
      %v392 = vsel %vm390, %v391, 0
      %v394 = vand.u32 %v362, %v392
      %v397 = vand.u32 %v363, %v392
      %399 = vmatprep.subr.bf16.mxu0 %v397
      %400 = vmatpush1.bf16.msra.mxu0 %v394
      %401 = vmatprep.subr.bf16.mxu0 0
      %402 = vmatpush1.bf16.msra.mxu0 0
      %403 = vmatprep.subr.bf16.mxu0 0
      %404 = vmatpush1.bf16.msra.mxu0 0
      %405 = vmatprep.subr.bf16.mxu0 0
      %406 = vmatpush1.bf16.msra.mxu0 0
      %407 = vmatprep.subr.bf16.mxu0 0
      %408 = vmatpush1.bf16.msra.mxu0 0
      %409 = vmatprep.subr.bf16.mxu0 0
      %410 = vmatpush1.bf16.msra.mxu0 0
      %411 = vmatprep.subr.bf16.mxu0 0
      %412 = vmatpush1.bf16.msra.mxu0 0
      %413 = vmatprep.subr.bf16.mxu0 0
      %414 = vmatpush1.bf16.msra.mxu0 0
      %415 = vmatprep.subr.bf16.mxu0 0
      %416 = vmatpush1.bf16.msra.mxu0 0
      %417 = vmatprep.subr.bf16.mxu0 0
      %418 = vmatpush1.bf16.msra.mxu0 0
      %419 = vmatprep.subr.bf16.mxu0 0
      %420 = vmatpush1.bf16.msra.mxu0 0
      %421 = vmatprep.subr.bf16.mxu0 0
      %422 = vmatpush1.bf16.msra.mxu0 0
      %423 = vmatprep.subr.bf16.mxu0 0
      %424 = vmatpush1.bf16.msra.mxu0 0
      %425 = vmatprep.subr.bf16.mxu0 0
      %426 = vmatpush1.bf16.msra.mxu0 0
      %427 = vmatprep.subr.bf16.mxu0 0
      %428 = vmatpush1.bf16.msra.mxu0 0
      %429 = vmatprep.subr.bf16.mxu0 0
      %430 = vmatpush1.bf16.msra.mxu0 0
      %431 = vmatprep.mubr.bf16.mxu0 0
      %432 = vmatmul.mubr.bf16.gmra.mrb[0].mxu0 %v366
      %v433 = vpop.f32.mrb[0].mxu0
      %v434 = vadd.f32 0.0, %v433
      %v435 = vpop.f32.mrb[0].mxu0
      %v436 = vadd.f32 0.0, %v435
      %v437 = vpop.f32.mrb[0].mxu0
      %v438 = vadd.f32 0.0, %v437
      %v439 = vpop.f32.mrb[0].mxu0
      %v440 = vadd.f32 0.0, %v439
      %441 = vmatprep.mubr.bf16.mxu0 0
      %442 = vmatmul.mubr.bf16.gmra.mrb[0].mxu0 %v369
      %v443 = vpop.f32.mrb[0].mxu0
      %v444 = vadd.f32 0.0, %v443
      %v445 = vpop.f32.mrb[0].mxu0
      %v446 = vadd.f32 0.0, %v445
      %v447 = vpop.f32.mrb[0].mxu0
      %v448 = vadd.f32 0.0, %v447
      %v449 = vpop.f32.mrb[0].mxu0
      %v450 = vadd.f32 0.0, %v449
      %451 = vmatprep.mubr.bf16.mxu0 0
      %452 = vmatmul.mubr.bf16.gmra.mrb[0].mxu0 %v372
      %v453 = vpop.f32.mrb[0].mxu0
      %v454 = vadd.f32 0.0, %v453
      %v455 = vpop.f32.mrb[0].mxu0
      %v456 = vadd.f32 0.0, %v455
      %v457 = vpop.f32.mrb[0].mxu0
      %v458 = vadd.f32 0.0, %v457
      %v459 = vpop.f32.mrb[0].mxu0
      %v460 = vadd.f32 0.0, %v459
      %461 = vmatprep.mubr.bf16.mxu0 0
      %462 = vmatmul.mubr.bf16.gmra.mrb[0].mxu0 %v375
      %v463 = vpop.f32.mrb[0].mxu0
      %v464 = vadd.f32 0.0, %v463
      %v465 = vpop.f32.mrb[0].mxu0
      %v466 = vadd.f32 0.0, %v465
      %v467 = vpop.f32.mrb[0].mxu0
      %v468 = vadd.f32 0.0, %v467
      %v469 = vpop.f32.mrb[0].mxu0
      %v470 = vadd.f32 0.0, %v469
      %471 = vmatprep.mubr.bf16.mxu0 0
      %472 = vmatmul.mubr.bf16.gmra.mrb[0].mxu0 %v378
      %v473 = vpop.f32.mrb[0].mxu0
      %v474 = vadd.f32 0.0, %v473
      %v475 = vpop.f32.mrb[0].mxu0
      %v476 = vadd.f32 0.0, %v475
      %v477 = vpop.f32.mrb[0].mxu0
      %v478 = vadd.f32 0.0, %v477
      %v479 = vpop.f32.mrb[0].mxu0
      %v480 = vadd.f32 0.0, %v479
      %481 = vmatprep.mubr.bf16.mxu0 0
      %482 = vmatmul.mubr.bf16.gmra.mrb[0].mxu0 %v381
      %v483 = vpop.f32.mrb[0].mxu0
      %v484 = vadd.f32 0.0, %v483
      %v485 = vpop.f32.mrb[0].mxu0
      %v486 = vadd.f32 0.0, %v485
      %v487 = vpop.f32.mrb[0].mxu0
      %v488 = vadd.f32 0.0, %v487
      %v489 = vpop.f32.mrb[0].mxu0
      %v490 = vadd.f32 0.0, %v489
      %491 = vmatprep.mubr.bf16.mxu0 0
      %492 = vmatmul.mubr.bf16.gmra.mrb[0].mxu0 %v384
      %v493 = vpop.f32.mrb[0].mxu0
      %v494 = vadd.f32 0.0, %v493
      %v495 = vpop.f32.mrb[0].mxu0
      %v496 = vadd.f32 0.0, %v495
      %v497 = vpop.f32.mrb[0].mxu0
      %v498 = vadd.f32 0.0, %v497
      %v499 = vpop.f32.mrb[0].mxu0
      %v500 = vadd.f32 0.0, %v499
      %501 = vmatprep.mubr.bf16.mxu0 0
      %502 = vmatmul.mubr.bf16.gmra.mrb[0].mxu0 %v387
      %v503 = vpop.f32.mrb[0].mxu0
      %v504 = vadd.f32 0.0, %v503
      %v505 = vpop.f32.mrb[0].mxu0
      %v506 = vadd.f32 0.0, %v505
      %v507 = vpop.f32.mrb[0].mxu0
      %v508 = vadd.f32 0.0, %v507
      %v509 = vpop.f32.mrb[0].mxu0
      %v510 = vadd.f32 0.0, %v509
      %511 = vdwg.mxu0
      %v528 = vunpack.c.l.b16 %v278
      %v529 = vunpack.c.l.b16 %v279
      %v530 = vunpack.c.l.b16 %v280
      %v531 = vunpack.c.l.b16 %v281
      %v532 = vunpack.c.l.b16 %v282
      %v533 = vunpack.c.l.b16 %v283
      %v534 = vunpack.c.l.b16 %v284
      %v535 = vunpack.c.l.b16 %v285
      %v536 = vunpack.c.l.b16 %v286
      %v537 = vunpack.c.l.b16 %v287
      %v538 = vunpack.c.l.b16 %v288
      %v539 = vunpack.c.l.b16 %v289
      %v540 = vunpack.c.l.b16 %v290
      %v541 = vunpack.c.l.b16 %v291
      %v542 = vunpack.c.l.b16 %v292
      %v543 = vunpack.c.l.b16 %v293
      %v544 = vpack.c.b16 %v529, %v528
      %v545 = vpack.c.b16 %v531, %v530
      %v546 = vpack.c.b16 %v533, %v532
      %v547 = vpack.c.b16 %v535, %v534
      %v548 = vpack.c.b16 %v537, %v536
      %v549 = vpack.c.b16 %v539, %v538
      %v550 = vpack.c.b16 %v541, %v540
      %v551 = vpack.c.b16 %v543, %v542
      %v556 = vunpack.c.l.b16 %v294
      %v557 = vunpack.c.h.b16 %v294
      %v558 = vunpack.c.l.b16 %v295
      %v559 = vunpack.c.h.b16 %v295
      %v560 = vunpack.c.l.b16 %v296
      %v561 = vunpack.c.h.b16 %v296
      %v562 = vunpack.c.l.b16 %v297
      %v563 = vunpack.c.h.b16 %v297
      %v564 = vpack.c.b16 %v558, %v556
      %v565 = vpack.c.b16 %v559, %v557
      %v566 = vpack.c.b16 %v562, %v560
      %v567 = vpack.c.b16 %v563, %v561
      %vm572 = vcmask 261120
      %v574 = vsel %vm572, %v544, 0
      %v577 = vsel %vm572, %v545, 0
      %v580 = vsel %vm572, %v546, 0
      %v583 = vsel %vm572, %v547, 0
      %v586 = vsel %vm572, %v548, 0
      %v589 = vsel %vm572, %v549, 0
      %v592 = vsel %vm572, %v550, 0
      %v595 = vsel %vm572, %v551, 0
      %597 = vmatprep.subr.bf16.mxu0 %v565
      %598 = vmatpush1.bf16.msra.mxu0 %v564
      %599 = vmatprep.subr.bf16.mxu0 %v567
      %600 = vmatpush1.bf16.msra.mxu0 %v566
      %601 = vmatprep.subr.bf16.mxu0 0
      %602 = vmatpush1.bf16.msra.mxu0 0
      %603 = vmatprep.subr.bf16.mxu0 0
      %604 = vmatpush1.bf16.msra.mxu0 0
      %605 = vmatprep.subr.bf16.mxu0 0
      %606 = vmatpush1.bf16.msra.mxu0 0
      %607 = vmatprep.subr.bf16.mxu0 0
      %608 = vmatpush1.bf16.msra.mxu0 0
      %609 = vmatprep.subr.bf16.mxu0 0
      %610 = vmatpush1.bf16.msra.mxu0 0
      %611 = vmatprep.subr.bf16.mxu0 0
      %612 = vmatpush1.bf16.msra.mxu0 0
      %613 = vmatprep.subr.bf16.mxu0 0
      %614 = vmatpush1.bf16.msra.mxu0 0
      %615 = vmatprep.subr.bf16.mxu0 0
      %616 = vmatpush1.bf16.msra.mxu0 0
      %617 = vmatprep.subr.bf16.mxu0 0
      %618 = vmatpush1.bf16.msra.mxu0 0
      %619 = vmatprep.subr.bf16.mxu0 0
      %620 = vmatpush1.bf16.msra.mxu0 0
      %621 = vmatprep.subr.bf16.mxu0 0
      %622 = vmatpush1.bf16.msra.mxu0 0
      %623 = vmatprep.subr.bf16.mxu0 0
      %624 = vmatpush1.bf16.msra.mxu0 0
      %625 = vmatprep.subr.bf16.mxu0 0
      %626 = vmatpush1.bf16.msra.mxu0 0
      %627 = vmatprep.subr.bf16.mxu0 0
      %628 = vmatpush1.bf16.msra.mxu0 0
      %629 = vmatprep.mubr.bf16.mxu0 0
      %630 = vmatmul.mubr.bf16.gmra.mrb[0].mxu0 %v574
      %v631 = vpop.f32.mrb[0].mxu0
      %v632 = vadd.f32 %v434, %v631
      %v633 = vpop.f32.mrb[0].mxu0
      %v634 = vadd.f32 %v436, %v633
      %v635 = vpop.f32.mrb[0].mxu0
      %v636 = vadd.f32 %v438, %v635
      %v637 = vpop.f32.mrb[0].mxu0
      %v638 = vadd.f32 %v440, %v637
      %639 = vmatprep.mubr.bf16.mxu0 0
      %640 = vmatmul.mubr.bf16.gmra.mrb[0].mxu0 %v577
      %v641 = vpop.f32.mrb[0].mxu0
      %v642 = vadd.f32 %v444, %v641
      %v643 = vpop.f32.mrb[0].mxu0
      %v644 = vadd.f32 %v446, %v643
      %v645 = vpop.f32.mrb[0].mxu0
      %v646 = vadd.f32 %v448, %v645
      %v647 = vpop.f32.mrb[0].mxu0
      %v648 = vadd.f32 %v450, %v647
      %649 = vmatprep.mubr.bf16.mxu0 0
      %650 = vmatmul.mubr.bf16.gmra.mrb[0].mxu0 %v580
      %v651 = vpop.f32.mrb[0].mxu0
      %v652 = vadd.f32 %v454, %v651
      %v653 = vpop.f32.mrb[0].mxu0
      %v654 = vadd.f32 %v456, %v653
      %v655 = vpop.f32.mrb[0].mxu0
      %v656 = vadd.f32 %v458, %v655
      %v657 = vpop.f32.mrb[0].mxu0
      %v658 = vadd.f32 %v460, %v657
      %659 = vmatprep.mubr.bf16.mxu0 0
      %660 = vmatmul.mubr.bf16.gmra.mrb[0].mxu0 %v583
      %v661 = vpop.f32.mrb[0].mxu0
      %v662 = vadd.f32 %v464, %v661
      %v663 = vpop.f32.mrb[0].mxu0
      %v664 = vadd.f32 %v466, %v663
      %v665 = vpop.f32.mrb[0].mxu0
      %v666 = vadd.f32 %v468, %v665
      %v667 = vpop.f32.mrb[0].mxu0
      %v668 = vadd.f32 %v470, %v667
      %669 = vmatprep.mubr.bf16.mxu0 0
      %670 = vmatmul.mubr.bf16.gmra.mrb[0].mxu0 %v586
      %v671 = vpop.f32.mrb[0].mxu0
      %v672 = vadd.f32 %v474, %v671
      %v673 = vpop.f32.mrb[0].mxu0
      %v674 = vadd.f32 %v476, %v673
      %v675 = vpop.f32.mrb[0].mxu0
      %v676 = vadd.f32 %v478, %v675
      %v677 = vpop.f32.mrb[0].mxu0
      %v678 = vadd.f32 %v480, %v677
      %679 = vmatprep.mubr.bf16.mxu0 0
      %680 = vmatmul.mubr.bf16.gmra.mrb[0].mxu0 %v589
      %v681 = vpop.f32.mrb[0].mxu0
      %v682 = vadd.f32 %v484, %v681
      %v683 = vpop.f32.mrb[0].mxu0
      %v684 = vadd.f32 %v486, %v683
      %v685 = vpop.f32.mrb[0].mxu0
      %v686 = vadd.f32 %v488, %v685
      %v687 = vpop.f32.mrb[0].mxu0
      %v688 = vadd.f32 %v490, %v687
      %689 = vmatprep.mubr.bf16.mxu0 0
      %690 = vmatmul.mubr.bf16.gmra.mrb[0].mxu0 %v592
      %v691 = vpop.f32.mrb[0].mxu0
      %v692 = vadd.f32 %v494, %v691
      %v693 = vpop.f32.mrb[0].mxu0
      %v694 = vadd.f32 %v496, %v693
      %v695 = vpop.f32.mrb[0].mxu0
      %v696 = vadd.f32 %v498, %v695
      %v697 = vpop.f32.mrb[0].mxu0
      %v698 = vadd.f32 %v500, %v697
      %699 = vmatprep.mubr.bf16.mxu0 0
      %700 = vmatmul.mubr.bf16.gmra.mrb[0].mxu0 %v595
      %v701 = vpop.f32.mrb[0].mxu0
      %v702 = vadd.f32 %v504, %v701
      %v703 = vpop.f32.mrb[0].mxu0
      %v704 = vadd.f32 %v506, %v703
      %v705 = vpop.f32.mrb[0].mxu0
      %v706 = vadd.f32 %v508, %v705
      %v707 = vpop.f32.mrb[0].mxu0
      %v708 = vadd.f32 %v510, %v707
      %709 = vdwg.mxu0
      %v710 = vld [vmem:[%s4] sm:$0x3]
      %v712 = vlaneseq
      %v713 = vshrl.u32 %v712, 7
      %v714 = vsub.s32 0, %v713
      %v715 = vrot.slane %v710, %v714
      %v716 = vlaneseq
      %v717 = vshrl.u32 %v716, 7
      %v718 = vsub.s32 1, %v717
      %v719 = vrot.slane %v710, %v718
      %v722 = vadd.f32 %v632, %v715
      %v723 = vadd.f32 %v634, %v719
      %v724 = vadd.f32 %v636, %v715
      %v725 = vadd.f32 %v638, %v719
      %v726 = vadd.f32 %v642, %v715
      %v727 = vadd.f32 %v644, %v719
      %v728 = vadd.f32 %v646, %v715
      %v729 = vadd.f32 %v648, %v719
      %v730 = vadd.f32 %v652, %v715
      %v731 = vadd.f32 %v654, %v719
      %v732 = vadd.f32 %v656, %v715
      %v733 = vadd.f32 %v658, %v719
      %v734 = vadd.f32 %v662, %v715
      %v735 = vadd.f32 %v664, %v719
      %v736 = vadd.f32 %v666, %v715
      %v737 = vadd.f32 %v668, %v719
      %v738 = vadd.f32 %v672, %v715
      %v739 = vadd.f32 %v674, %v719
      %v740 = vadd.f32 %v676, %v715
      %v741 = vadd.f32 %v678, %v719
      %v742 = vadd.f32 %v682, %v715
      %v743 = vadd.f32 %v684, %v719
      %v744 = vadd.f32 %v686, %v715
      %v745 = vadd.f32 %v688, %v719
      %v746 = vadd.f32 %v692, %v715
      %v747 = vadd.f32 %v694, %v719
      %v748 = vadd.f32 %v696, %v715
      %v749 = vadd.f32 %v698, %v719
      %v750 = vadd.f32 %v702, %v715
      %v751 = vadd.f32 %v704, %v719
      %v752 = vadd.f32 %v706, %v715
      %v753 = vadd.f32 %v708, %v719
      %v754 = vmax.f32 %v722, 0.0
      %v755 = vmax.f32 %v723, 0.0
      %v756 = vmax.f32 %v724, 0.0
      %v757 = vmax.f32 %v725, 0.0
      %v758 = vmax.f32 %v726, 0.0
      %v759 = vmax.f32 %v727, 0.0
      %v760 = vmax.f32 %v728, 0.0
      %v761 = vmax.f32 %v729, 0.0
      %v762 = vmax.f32 %v730, 0.0
      %v763 = vmax.f32 %v731, 0.0
      %v764 = vmax.f32 %v732, 0.0
      %v765 = vmax.f32 %v733, 0.0
      %v766 = vmax.f32 %v734, 0.0
      %v767 = vmax.f32 %v735, 0.0
      %v768 = vmax.f32 %v736, 0.0
      %v769 = vmax.f32 %v737, 0.0
      %v770 = vmax.f32 %v738, 0.0
      %v771 = vmax.f32 %v739, 0.0
      %v772 = vmax.f32 %v740, 0.0
      %v773 = vmax.f32 %v741, 0.0
      %v774 = vmax.f32 %v742, 0.0
      %v775 = vmax.f32 %v743, 0.0
      %v776 = vmax.f32 %v744, 0.0
      %v777 = vmax.f32 %v745, 0.0
      %v778 = vmax.f32 %v746, 0.0
      %v779 = vmax.f32 %v747, 0.0
      %v780 = vmax.f32 %v748, 0.0
      %v781 = vmax.f32 %v749, 0.0
      %v782 = vmax.f32 %v750, 0.0
      %v783 = vmax.f32 %v751, 0.0
      %v784 = vmax.f32 %v752, 0.0
      %v785 = vmax.f32 %v753, 0.0
      %v786 = vld [vmem:[%s5] sm:$0xff]
      %v787 = vld [vmem:[%s5 + $0x8] sm:$0xff]
      %v788 = vld [vmem:[%s5 + $0x10] sm:$0xff]
      %v789 = vld [vmem:[%s5 + $0x18] sm:$0xff]
      %v790 = vld [vmem:[%s5 + $0x20] sm:$0xff]
      %v791 = vld [vmem:[%s5 + $0x28] sm:$0xff]
      %v792 = vld [vmem:[%s5 + $0x30] sm:$0xff]
      %v793 = vld [vmem:[%s5 + $0x38] sm:$0xff]
      %v794 = vld [vmem:[%s5 + $0x40] sm:$0xff]
      %v795 = vld [vmem:[%s5 + $0x48] sm:$0xff]
      %v796 = vld [vmem:[%s5 + $0x50] sm:$0xff]
      %v797 = vld [vmem:[%s5 + $0x58] sm:$0xff]
      %v798 = vld [vmem:[%s5 + $0x60] sm:$0xff]
      %v799 = vld [vmem:[%s5 + $0x68] sm:$0xff]
      %v800 = vld [vmem:[%s5 + $0x70] sm:$0xff]
      %v801 = vld [vmem:[%s5 + $0x78] sm:$0xff]
      %v802 = vld [vmem:[%s5 + $0x80] sm:$0xff]
      %v803 = vld [vmem:[%s5 + $0x88] sm:$0xff]
      %v804 = vld [vmem:[%s5 + $0x90] sm:$0xff]
      %v805 = vld [vmem:[%s5 + $0x98] sm:$0xff]
      %v806 = vld [vmem:[%s5 + $0xa0] sm:$0xff]
      %v807 = vld [vmem:[%s5 + $0xa8] sm:$0xff]
      %v808 = vld [vmem:[%s5 + $0xb0] sm:$0xff]
      %v809 = vld [vmem:[%s5 + $0xb8] sm:$0xff]
      %v810 = vld [vmem:[%s5 + $0xc0] sm:$0xff]
      %v811 = vld [vmem:[%s5 + $0xc8] sm:$0xff]
      %v812 = vld [vmem:[%s5 + $0xd0] sm:$0xff]
      %v813 = vld [vmem:[%s5 + $0xd8] sm:$0xff]
      %v814 = vld [vmem:[%s5 + $0xe0] sm:$0xff]
      %v815 = vld [vmem:[%s5 + $0xe8] sm:$0xff]
      %v816 = vld [vmem:[%s5 + $0xf0] sm:$0xff]
      %v817 = vld [vmem:[%s5 + $0xf8] sm:$0xff]
      %818 = vmatprep.subr.mxu0 0.0
      %819 = vmatpush1.msra.mxu0 %v786
      %820 = vmatprep.subr.mxu0 0.0
      %821 = vmatpush1.msra.mxu0 %v787
      %822 = vmatprep.subr.mxu0 0.0
      %823 = vmatpush1.msra.mxu0 %v788
      %824 = vmatprep.subr.mxu0 0.0
      %825 = vmatpush1.msra.mxu0 %v789
      %826 = vmatprep.subr.mxu0 0.0
      %827 = vmatpush1.msra.mxu0 %v790
      %828 = vmatprep.subr.mxu0 0.0
      %829 = vmatpush1.msra.mxu0 %v791
      %830 = vmatprep.subr.mxu0 0.0
      %831 = vmatpush1.msra.mxu0 %v792
      %832 = vmatprep.subr.mxu0 0.0
      %833 = vmatpush1.msra.mxu0 %v793
      %834 = vmatprep.subr.mxu0 0.0
      %835 = vmatpush1.msra.mxu0 %v794
      %836 = vmatprep.subr.mxu0 0.0
      %837 = vmatpush1.msra.mxu0 %v795
      %838 = vmatprep.subr.mxu0 0.0
      %839 = vmatpush1.msra.mxu0 %v796
      %840 = vmatprep.subr.mxu0 0.0
      %841 = vmatpush1.msra.mxu0 %v797
      %842 = vmatprep.subr.mxu0 0.0
      %843 = vmatpush1.msra.mxu0 %v798
      %844 = vmatprep.subr.mxu0 0.0
      %845 = vmatpush1.msra.mxu0 %v799
      %846 = vmatprep.subr.mxu0 0.0
      %847 = vmatpush1.msra.mxu0 %v800
      %848 = vmatprep.subr.mxu0 0.0
      %849 = vmatpush1.msra.mxu0 %v801
      %850 = vmatprep.subr.mxu0 0.0
      %851 = vmatpush1.msra.mxu0 %v802
      %852 = vmatprep.subr.mxu0 0.0
      %853 = vmatpush1.msra.mxu0 %v803
      %854 = vmatprep.subr.mxu0 0.0
      %855 = vmatpush1.msra.mxu0 %v804
      %856 = vmatprep.subr.mxu0 0.0
      %857 = vmatpush1.msra.mxu0 %v805
      %858 = vmatprep.subr.mxu0 0.0
      %859 = vmatpush1.msra.mxu0 %v806
      %860 = vmatprep.subr.mxu0 0.0
      %861 = vmatpush1.msra.mxu0 %v807
      %862 = vmatprep.subr.mxu0 0.0
      %863 = vmatpush1.msra.mxu0 %v808
      %864 = vmatprep.subr.mxu0 0.0
      %865 = vmatpush1.msra.mxu0 %v809
      %866 = vmatprep.subr.mxu0 0.0
      %867 = vmatpush1.msra.mxu0 %v810
      %868 = vmatprep.subr.mxu0 0.0
      %869 = vmatpush1.msra.mxu0 %v811
      %870 = vmatprep.subr.mxu0 0.0
      %871 = vmatpush1.msra.mxu0 %v812
      %872 = vmatprep.subr.mxu0 0.0
      %873 = vmatpush1.msra.mxu0 %v813
      %874 = vmatprep.subr.mxu0 0.0
      %875 = vmatpush1.msra.mxu0 %v814
      %876 = vmatprep.subr.mxu0 0.0
      %877 = vmatpush1.msra.mxu0 %v815
      %878 = vmatprep.subr.mxu0 0.0
      %879 = vmatpush1.msra.mxu0 %v816
      %880 = vmatprep.subr.mxu0 0.0
      %881 = vmatpush1.msra.mxu0 %v817
      %882 = vmatprep.mubr.f32.mxu0 %v755
      %883 = vmatmul.mubr.f32.gmra.mrb[0].mxu0 %v754
      %v884 = vpop.f32.mrb[0].mxu0
      %v885 = vadd.f32 0.0, %v884
      %v886 = vpop.f32.mrb[0].mxu0
      %887 = vmatprep.mubr.f32.mxu0 %v757
      %888 = vmatmul.mubr.f32.gmra.mrb[0].mxu0 %v756
      %v889 = vpop.f32.mrb[0].mxu0
      %v890 = vadd.f32 0.0, %v889
      %v891 = vpop.f32.mrb[0].mxu0
      %892 = vmatprep.mubr.f32.mxu0 %v759
      %893 = vmatmul.mubr.f32.gmra.mrb[0].mxu0 %v758
      %v894 = vpop.f32.mrb[0].mxu0
      %v895 = vadd.f32 0.0, %v894
      %v896 = vpop.f32.mrb[0].mxu0
      %897 = vmatprep.mubr.f32.mxu0 %v761
      %898 = vmatmul.mubr.f32.gmra.mrb[0].mxu0 %v760
      %v899 = vpop.f32.mrb[0].mxu0
      %v900 = vadd.f32 0.0, %v899
      %v901 = vpop.f32.mrb[0].mxu0
      %902 = vmatprep.mubr.f32.mxu0 %v763
      %903 = vmatmul.mubr.f32.gmra.mrb[0].mxu0 %v762
      %v904 = vpop.f32.mrb[0].mxu0
      %v905 = vadd.f32 0.0, %v904
      %v906 = vpop.f32.mrb[0].mxu0
      %907 = vmatprep.mubr.f32.mxu0 %v765
      %908 = vmatmul.mubr.f32.gmra.mrb[0].mxu0 %v764
      %v909 = vpop.f32.mrb[0].mxu0
      %v910 = vadd.f32 0.0, %v909
      %v911 = vpop.f32.mrb[0].mxu0
      %912 = vmatprep.mubr.f32.mxu0 %v767
      %913 = vmatmul.mubr.f32.gmra.mrb[0].mxu0 %v766
      %v914 = vpop.f32.mrb[0].mxu0
      %v915 = vadd.f32 0.0, %v914
      %v916 = vpop.f32.mrb[0].mxu0
      %917 = vmatprep.mubr.f32.mxu0 %v769
      %918 = vmatmul.mubr.f32.gmra.mrb[0].mxu0 %v768
      %v919 = vpop.f32.mrb[0].mxu0
      %v920 = vadd.f32 0.0, %v919
      %v921 = vpop.f32.mrb[0].mxu0
      %922 = vmatprep.mubr.f32.mxu0 %v771
      %923 = vmatmul.mubr.f32.gmra.mrb[0].mxu0 %v770
      %v924 = vpop.f32.mrb[0].mxu0
      %v925 = vadd.f32 0.0, %v924
      %v926 = vpop.f32.mrb[0].mxu0
      %927 = vmatprep.mubr.f32.mxu0 %v773
      %928 = vmatmul.mubr.f32.gmra.mrb[0].mxu0 %v772
      %v929 = vpop.f32.mrb[0].mxu0
      %v930 = vadd.f32 0.0, %v929
      %v931 = vpop.f32.mrb[0].mxu0
      %932 = vmatprep.mubr.f32.mxu0 %v775
      %933 = vmatmul.mubr.f32.gmra.mrb[0].mxu0 %v774
      %v934 = vpop.f32.mrb[0].mxu0
      %v935 = vadd.f32 0.0, %v934
      %v936 = vpop.f32.mrb[0].mxu0
      %937 = vmatprep.mubr.f32.mxu0 %v777
      %938 = vmatmul.mubr.f32.gmra.mrb[0].mxu0 %v776
      %v939 = vpop.f32.mrb[0].mxu0
      %v940 = vadd.f32 0.0, %v939
      %v941 = vpop.f32.mrb[0].mxu0
      %942 = vmatprep.mubr.f32.mxu0 %v779
      %943 = vmatmul.mubr.f32.gmra.mrb[0].mxu0 %v778
      %v944 = vpop.f32.mrb[0].mxu0
      %v945 = vadd.f32 0.0, %v944
      %v946 = vpop.f32.mrb[0].mxu0
      %947 = vmatprep.mubr.f32.mxu0 %v781
      %948 = vmatmul.mubr.f32.gmra.mrb[0].mxu0 %v780
      %v949 = vpop.f32.mrb[0].mxu0
      %v950 = vadd.f32 0.0, %v949
      %v951 = vpop.f32.mrb[0].mxu0
      %952 = vmatprep.mubr.f32.mxu0 %v783
      %953 = vmatmul.mubr.f32.gmra.mrb[0].mxu0 %v782
      %v954 = vpop.f32.mrb[0].mxu0
      %v955 = vadd.f32 0.0, %v954
      %v956 = vpop.f32.mrb[0].mxu0
      %957 = vmatprep.mubr.f32.mxu0 %v785
      %958 = vmatmul.mubr.f32.gmra.mrb[0].mxu0 %v784
      %v959 = vpop.f32.mrb[0].mxu0
      %v960 = vadd.f32 0.0, %v959
      %v961 = vpop.f32.mrb[0].mxu0
      %962 = vdwg.mxu0
      %vm963 = vcmask 7168
      %964 = vst.msk [vmem:[%s275] sm:$0xff] %vm963, %v885
      %965 = vst.msk [vmem:[%s275 + $0x8] sm:$0xff] %vm963, %v890
      %966 = vst.msk [vmem:[%s275 + $0x10] sm:$0xff] %vm963, %v895
      %967 = vst.msk [vmem:[%s275 + $0x18] sm:$0xff] %vm963, %v900
      %968 = vst.msk [vmem:[%s275 + $0x20] sm:$0xff] %vm963, %v905
      %969 = vst.msk [vmem:[%s275 + $0x28] sm:$0xff] %vm963, %v910
      %970 = vst.msk [vmem:[%s275 + $0x30] sm:$0xff] %vm963, %v915
      %971 = vst.msk [vmem:[%s275 + $0x38] sm:$0xff] %vm963, %v920
      %972 = vst.msk [vmem:[%s275 + $0x40] sm:$0xff] %vm963, %v925
      %973 = vst.msk [vmem:[%s275 + $0x48] sm:$0xff] %vm963, %v930
      %974 = vst.msk [vmem:[%s275 + $0x50] sm:$0xff] %vm963, %v935
      %975 = vst.msk [vmem:[%s275 + $0x58] sm:$0xff] %vm963, %v940
      %976 = vst.msk [vmem:[%s275 + $0x60] sm:$0xff] %vm963, %v945
      %977 = vst.msk [vmem:[%s275 + $0x68] sm:$0xff] %vm963, %v950
      %978 = vst.msk [vmem:[%s275 + $0x70] sm:$0xff] %vm963, %v955
      %979 = vst.msk [vmem:[%s275 + $0x78] sm:$0xff] %vm963, %v960
      %s980 = smul.u32 16, %s17
      %p981 = scmp.lt.s32.totalorder %s980, 47
      %s982 = scalar_select %p981, %s980, 47
      %s983 = smul.addr %s982, 8
      %s984 = scalar_lea.vmem %s6, %s983
      // Predicated region
      $region45: #{tpu_custom_call.1} parent=43 // pred_check
        %p985 = pneg %p171
      $region46: #{tpu_custom_call.1} parent=43 // pred_check_branch
        %987 = sbr.rel (%p985) target = $region48
      $region47: #{tpu_custom_call.1} parent=43 // pred_region
        %s988 = smul.u32 16, %s17
      $region48: #{tpu_custom_call.1} parent=43 // pred_fallthru
        _
    $region44: #{tpu_custom_call.1} parent=5 // pred_fallthru
      _
    %p989 = scmp.le.s32.totalorder 2, %s12
    // Predicated region
    $region49: #{tpu_custom_call.1} parent=5 // pred_check
      %p990 = pneg %p989
    $region50: #{tpu_custom_call.1} parent=5 // pred_check_branch
      %992 = sbr.rel (%p990) target = $region52
    $region51: #{tpu_custom_call.1} parent=5 // pred_region
      %s993 = ssub.s32 %s12, 2
      // Predicated region
      $region53: #{tpu_custom_call.1} parent=51 // pred_check
        %p994 = pneg %p177
      $region54: #{tpu_custom_call.1} parent=51 // pred_check_branch
        %996 = sbr.rel (%p994) target = $region56
      $region55: #{tpu_custom_call.1} parent=51 // pred_region
        %s997 = smul.u32 16, %s18
        %p998 = scmp.lt.s32.totalorder %s997, 47
        %s999 = scalar_select %p998, %s997, 47
        %s1000 = smul.addr %s999, 8
        %s1001 = scalar_lea.vmem %s6, %s1000
      $region56: #{tpu_custom_call.1} parent=51 // pred_fallthru
        _
    $region52: #{tpu_custom_call.1} parent=5 // pred_fallthru
      _
  $region6: #{tpu_custom_call.1} parent=0 // loop_footer
    %s16 = sadd.s32 1, %s12
  $region7: #{tpu_custom_call.1} parent=0 // loop_footer_branch
    %11 = sbr.rel target = $region3
  $region8: #{tpu_custom_call.1} parent=0 // loop_exit
    _

</llo_original>
